<compile_context>
chip_gen: v5e
topology: v5e:2x2
jax: 0.10.0
libtpu: 0.0.40
codegen_flags: <defaults>
</compile_context>

<pallas_src>
import jax
import jax.numpy as jnp
from jax.experimental import pallas as pl
from jax.experimental.pallas import tpu as pltpu

HIDDEN = 64          # fc1/fc2 width of the PyTorch module
H_PAD = 128          # hidden padded to a full 128-lane vreg width
NEG_BIG = -1e30      # bias for padded softmax columns -> exp() underflows to 0


def _round_up(a, b):
    return ((a + b - 1) // b) * b


def _num_tensorcores():
    """Best-effort TensorCore count: 2 on v7x, 1 on v5e/v6e."""
    try:
        kind = jax.devices()[0].device_kind.lower()
        if "v7" in kind or "7x" in kind:
            return 2
    except Exception:
        pass
    return 1


def _kernel(x_ref, w1_ref, w2_ref, w3_ref, b_ref, o_ref):
    cdt = w1_ref.dtype                      # compute dtype (bf16)
    b = b_ref[...]                          # (3, n_out_pad) f32, tiny
    b1 = b[0:1, :H_PAD]
    b2 = b[1:2, :H_PAD]
    b3 = b[2:3, :]

    # fc1 + relu (f32 accumulation on the MXU, bias added in f32)
    h1 = jnp.dot(x_ref[...], w1_ref[...], preferred_element_type=jnp.float32)
    h1 = jnp.maximum(h1 + b1, 0.0)

    # fc2 + relu
    h2 = jnp.dot(h1.astype(cdt), w2_ref[...], preferred_element_type=jnp.float32)
    h2 = jnp.maximum(h2 + b2, 0.0)

    # fc3 (padded columns carry NEG_BIG bias -> zero softmax mass)
    logits = jnp.dot(h2.astype(cdt), w3_ref[...], preferred_element_type=jnp.float32)
    logits = logits + b3

    # softmax over the last (agent) axis, max-stabilized
    m = jnp.max(logits, axis=-1, keepdims=True)
    e = jnp.exp(logits - m)
    denom = jnp.sum(e, axis=-1, keepdims=True)
    o_ref[...] = (e * pl.reciprocal(denom, approx=True)).astype(o_ref.dtype)


def prepare_params(w1, b1, w2, b2, w3, b3, compute_dtype=jnp.bfloat16):
    """Pad weights to lane-dense 128-wide blocks and cast to bf16 ONCE.

    Do this at init time; per-forward calls then only DMA the prepared,
    already-padded parameters (no per-call pad/cast XLA ops).
    Weights are (in_features, out_features); biases are (1, out_features).
    Returns (w1_p, w2_p, w3_p, bias_stack).
    """
    obs_len = w1.shape[0]
    n_agent = w3.shape[1]
    n_out_pad = max(H_PAD, _round_up(n_agent, 128))

    w1_p = jnp.zeros((obs_len, H_PAD), jnp.float32).at[:, :HIDDEN].set(w1)
    w2_p = jnp.zeros((H_PAD, H_PAD), jnp.float32).at[:HIDDEN, :HIDDEN].set(w2)
    w3_p = jnp.zeros((H_PAD, n_out_pad), jnp.float32).at[:HIDDEN, :n_agent].set(w3)

    # Single stacked f32 bias block (3, n_out_pad): one tiny DMA per step.
    bias = jnp.zeros((3, n_out_pad), jnp.float32)
    bias = bias.at[0, :HIDDEN].set(b1.reshape(-1))
    bias = bias.at[1, :HIDDEN].set(b2.reshape(-1))
    bias = bias.at[2, :].set(NEG_BIG)
    bias = bias.at[2, :n_agent].set(b3.reshape(-1))

    w1_p = jax.device_put(w1_p.astype(compute_dtype))
    w2_p = jax.device_put(w2_p.astype(compute_dtype))
    w3_p = jax.device_put(w3_p.astype(compute_dtype))
    bias = jax.device_put(bias)
    return w1_p, w2_p, w3_p, bias


def eoi_forward(x, w1_p, w2_p, w3_p, bias, n_agent, *,
                batch_tile=2048, out_dtype=jnp.bfloat16, return_padded=False):
    """Fused EOINet forward on pre-prepared (padded, bf16) parameters."""
    B, obs_len = x.shape
    assert w1_p.shape[0] == obs_len, "x feature dim must match prepared w1"
    n_out_pad = w3_p.shape[1]
    compute_dtype = w1_p.dtype

    # --- chip-aware batch tiling: one big tile per TensorCore when possible,
    # capped so the per-tile VMEM footprint stays under default scoped limits.
    cores = _num_tensorcores()
    bt = _round_up(pl.cdiv(B, cores), 16)          # 16 = bf16 sublane tile
    bt = min(bt, _round_up(batch_tile, 16))
    bt = max(bt, 16)
    B_pad = _round_up(B, bt)
    grid = (B_pad // bt,)

    # Per-call x prep: cast + zero-pad rows to the tile multiple (unavoidable).
    x_p = x.astype(compute_dtype)
    if B_pad != B:
        x_p = jnp.pad(x_p, ((0, B_pad - B), (0, 0)))

    rep = lambda shape: pl.BlockSpec(shape, lambda i: (0, 0))   # replicated

    itm = jnp.dtype(compute_dtype).itemsize
    flops = 2 * B_pad * (obs_len * H_PAD + H_PAD * H_PAD + H_PAD * n_out_pad)
    bytes_accessed = (B_pad * obs_len * itm                        # x
                      + (w1_p.size + w2_p.size + w3_p.size) * itm  # weights
                      + bias.size * 4                              # biases
                      + B_pad * n_out_pad * jnp.dtype(out_dtype).itemsize)

    out = pl.pallas_call(
        _kernel,
        out_shape=jax.ShapeDtypeStruct((B_pad, n_out_pad), out_dtype),
        grid_spec=pltpu.PrefetchScalarGridSpec(
            num_scalar_prefetch=0,
            grid=grid,
            in_specs=[
                pl.BlockSpec((bt, obs_len), lambda i: (i, 0)),   # x tile
                rep((obs_len, H_PAD)),                           # w1
                rep((H_PAD, H_PAD)),                             # w2
                rep((H_PAD, n_out_pad)),                         # w3
                rep((3, n_out_pad)),                             # stacked biases
            ],
            out_specs=pl.BlockSpec((bt, n_out_pad), lambda i: (i, 0)),
        ),
        compiler_params=pltpu.CompilerParams(
            dimension_semantics=("parallel",),
        ),
        cost_estimate=pl.CostEstimate(
            flops=flops,
            transcendentals=B_pad * n_out_pad,
            bytes_accessed=bytes_accessed,
        ),
    )(x_p, w1_p, w2_p, w3_p, bias)

    if return_padded:
        return out            # (B_pad, n_out_pad) bf16 slab, no extra copy
    return out[:B, :n_agent]


def init_params(key, obs_len, n_agent):
    """Deterministic synthetic init (uniform, PyTorch-Linear-like bounds)."""
    ks = jax.random.split(key, 6)

    def lin(kw, kb, fan_in, fan_out):
        bound = 1.0 / jnp.sqrt(fan_in)
        w = jax.random.uniform(kw, (fan_in, fan_out), jnp.float32, -bound, bound)
        b = jax.random.uniform(kb, (1, fan_out), jnp.float32, -bound, bound)
        return w, b

    w1, b1 = lin(ks[0], ks[1], obs_len, HIDDEN)
    w2, b2 = lin(ks[2], ks[3], HIDDEN, HIDDEN)
    w3, b3 = lin(ks[4], ks[5], HIDDEN, n_agent)
    return w1, b1, w2, b2, w3, b3


def reference_forward(x, w1, b1, w2, b2, w3, b3, compute_dtype=jnp.bfloat16):
    """Plain-JAX reference with the same bf16-in / f32-accumulate recipe."""
    cdt = compute_dtype
    h1 = jnp.maximum(
        jnp.dot(x.astype(cdt), w1.astype(cdt),
                preferred_element_type=jnp.float32) + b1, 0.0)
    h2 = jnp.maximum(
        jnp.dot(h1.astype(cdt), w2.astype(cdt),
                preferred_element_type=jnp.float32) + b2, 0.0)
    logits = jnp.dot(h2.astype(cdt), w3.astype(cdt),
                     preferred_element_type=jnp.float32) + b3
    return jax.nn.softmax(logits, axis=1)


if __name__ == "__main__":
    key = jax.random.PRNGKey(0)
    k_x, k_p = jax.random.split(key)

    batch, obs_len, n_agent = 32, 32, 5
    x = jax.random.normal(k_x, (batch, obs_len), dtype=jnp.float32)
    raw_params = init_params(k_p, obs_len, n_agent)

    # One-time parameter preparation (padding + bf16 cast) outside the
    # per-call path.
    w1_p, w2_p, w3_p, bias = prepare_params(*raw_params)

    out = jax.block_until_ready(
        eoi_forward(x, w1_p, w2_p, w3_p, bias, n_agent))
    ref = reference_forward(x, *raw_params)

    out_f32 = out.astype(jnp.float32)
    assert out.shape == (batch, n_agent)
    assert jnp.allclose(out_f32, ref, atol=8e-3, rtol=8e-3), \
        "mismatch vs JAX reference"
    assert jnp.allclose(jnp.sum(out_f32, axis=1), 1.0, atol=1e-2), \
        "softmax rows must sum (approximately) to 1"

    print("KERNEL_OK")
</pallas_src>

<mosaic_0001>
module attributes {stable_mosaic.version = 11 : i64} {
  func.func @_kernel(%arg0: i32, %arg1: memref<32x32xbf16, #tpu.memory_space<vmem>>, %arg2: memref<32x128xbf16, #tpu.memory_space<vmem>>, %arg3: memref<128x128xbf16, #tpu.memory_space<vmem>>, %arg4: memref<128x128xbf16, #tpu.memory_space<vmem>>, %arg5: memref<3x128xf32, #tpu.memory_space<vmem>>, %arg6: memref<32x128xbf16, #tpu.memory_space<vmem>>) attributes {dimension_semantics = [#tpu.dimension_semantics<parallel>], iteration_bounds = array<i64: 1>, scalar_prefetch = 0 : i64, scratch_operands = 0 : i64, tpu.core_type = #tpu.core_type<tc>, window_params = [{transform_indices = @transform_0, window_bounds = array<i64: 32, 32>}, {pipeline_mode = #tpu.pipeline_mode<synchronous>, transform_indices = @transform_1, window_bounds = array<i64: 32, 128>}, {pipeline_mode = #tpu.pipeline_mode<synchronous>, transform_indices = @transform_2, window_bounds = array<i64: 128, 128>}, {pipeline_mode = #tpu.pipeline_mode<synchronous>, transform_indices = @transform_3, window_bounds = array<i64: 128, 128>}, {pipeline_mode = #tpu.pipeline_mode<synchronous>, transform_indices = @transform_4, window_bounds = array<i64: 3, 128>}, {transform_indices = @transform_5, window_bounds = array<i64: 32, 128>}]} {
    %c0 = arith.constant 0 : index
    %c0_0 = arith.constant 0 : index
    %0 = vector.load %arg5[%c0, %c0_0] : memref<3x128xf32, #tpu.memory_space<vmem>>, vector<3x128xf32>
    %1 = vector.extract_strided_slice %0 {offsets = [0, 0], sizes = [1, 128], strides = [1, 1]} : vector<3x128xf32> to vector<1x128xf32>
    %2 = vector.extract_strided_slice %0 {offsets = [1, 0], sizes = [1, 128], strides = [1, 1]} : vector<3x128xf32> to vector<1x128xf32>
    %3 = vector.extract_strided_slice %0 {offsets = [2, 0], sizes = [1, 128], strides = [1, 1]} : vector<3x128xf32> to vector<1x128xf32>
    %c0_1 = arith.constant 0 : index
    %c0_2 = arith.constant 0 : index
    %4 = vector.load %arg1[%c0_1, %c0_2] : memref<32x32xbf16, #tpu.memory_space<vmem>>, vector<32x32xbf16>
    %c0_3 = arith.constant 0 : index
    %c0_4 = arith.constant 0 : index
    %5 = vector.load %arg2[%c0_3, %c0_4] : memref<32x128xbf16, #tpu.memory_space<vmem>>, vector<32x128xbf16>
    %cst = arith.constant dense<0.000000e+00> : vector<32x128xf32>
    %6 = tpu.matmul %4, %5, %cst {dimension_numbers = #tpu.dot_dimension_numbers<[1], [0], [0], [1], [0, 0, 1, 1], [], []>} : vector<32x32xbf16>, vector<32x128xbf16>, vector<32x128xf32> -> vector<32x128xf32>
    %7 = vector.broadcast %1 : vector<1x128xf32> to vector<32x128xf32>
    %8 = arith.addf %6, %7 : vector<32x128xf32>
    %cst_5 = arith.constant 0.000000e+00 : f32
    %9 = vector.broadcast %cst_5 : f32 to vector<32x128xf32>
    %10 = arith.maximumf %8, %9 : vector<32x128xf32>
    %11 = arith.truncf %10 : vector<32x128xf32> to vector<32x128xbf16>
    %c0_6 = arith.constant 0 : index
    %c0_7 = arith.constant 0 : index
    %12 = vector.load %arg3[%c0_6, %c0_7] : memref<128x128xbf16, #tpu.memory_space<vmem>>, vector<128x128xbf16>
    %cst_8 = arith.constant dense<0.000000e+00> : vector<32x128xf32>
    %13 = tpu.matmul %11, %12, %cst_8 {dimension_numbers = #tpu.dot_dimension_numbers<[1], [0], [0], [1], [0, 0, 1, 1], [], []>} : vector<32x128xbf16>, vector<128x128xbf16>, vector<32x128xf32> -> vector<32x128xf32>
    %14 = vector.broadcast %2 : vector<1x128xf32> to vector<32x128xf32>
    %15 = arith.addf %13, %14 : vector<32x128xf32>
    %cst_9 = arith.constant 0.000000e+00 : f32
    %16 = vector.broadcast %cst_9 : f32 to vector<32x128xf32>
    %17 = arith.maximumf %15, %16 : vector<32x128xf32>
    %18 = arith.truncf %17 : vector<32x128xf32> to vector<32x128xbf16>
    %c0_10 = arith.constant 0 : index
    %c0_11 = arith.constant 0 : index
    %19 = vector.load %arg4[%c0_10, %c0_11] : memref<128x128xbf16, #tpu.memory_space<vmem>>, vector<128x128xbf16>
    %cst_12 = arith.constant dense<0.000000e+00> : vector<32x128xf32>
    %20 = tpu.matmul %18, %19, %cst_12 {dimension_numbers = #tpu.dot_dimension_numbers<[1], [0], [0], [1], [0, 0, 1, 1], [], []>} : vector<32x128xbf16>, vector<128x128xbf16>, vector<32x128xf32> -> vector<32x128xf32>
    %21 = vector.broadcast %3 : vector<1x128xf32> to vector<32x128xf32>
    %22 = arith.addf %20, %21 : vector<32x128xf32>
    %cst_13 = arith.constant dense<0xFF800000> : vector<32xf32>
    %23 = vector.multi_reduction <maximumf>, %22, %cst_13 [1] : vector<32x128xf32> to vector<32xf32>
    %24 = vector.shape_cast %23 : vector<32xf32> to vector<32x1xf32>
    %25 = vector.broadcast %24 : vector<32x1xf32> to vector<32x128xf32>
    %26 = arith.subf %22, %25 : vector<32x128xf32>
    %27 = math.exp %26 : vector<32x128xf32>
    %cst_14 = arith.constant dense<0.000000e+00> : vector<32xf32>
    %28 = vector.multi_reduction <add>, %27, %cst_14 [1] : vector<32x128xf32> to vector<32xf32>
    %29 = vector.shape_cast %28 : vector<32xf32> to vector<32x1xf32>
    %30 = tpu.reciprocal %29 {approx = true} : vector<32x1xf32> -> vector<32x1xf32>
    %31 = vector.broadcast %30 : vector<32x1xf32> to vector<32x128xf32>
    %32 = arith.mulf %27, %31 : vector<32x128xf32>
    %33 = arith.truncf %32 : vector<32x128xf32> to vector<32x128xbf16>
    %c0_15 = arith.constant 0 : index
    %c0_16 = arith.constant 0 : index
    %34 = vector.load %arg6[%c0_15, %c0_16] : memref<32x128xbf16, #tpu.memory_space<vmem>>, vector<32x128xbf16>
    tpu.vector_store %arg6[%c0_15, %c0_16], %33 {strides = array<i32>} : memref<32x128xbf16, #tpu.memory_space<vmem>>, vector<32x128xbf16>,
    return
  }
  func.func @transform_0(%arg0: i32) -> (i32, i32) {
    %c0_i32 = arith.constant 0 : i32
    %c0_i32_0 = arith.constant 0 : i32
    return %arg0, %c0_i32 : i32, i32
  }
  func.func @transform_1(%arg0: i32) -> (i32, i32) {
    %c0_i32 = arith.constant 0 : i32
    %c0_i32_0 = arith.constant 0 : i32
    %c0_i32_1 = arith.constant 0 : i32
    return %c0_i32, %c0_i32_0 : i32, i32
  }
  func.func @transform_2(%arg0: i32) -> (i32, i32) {
    %c0_i32 = arith.constant 0 : i32
    %c0_i32_0 = arith.constant 0 : i32
    %c0_i32_1 = arith.constant 0 : i32
    return %c0_i32, %c0_i32_0 : i32, i32
  }
  func.func @transform_3(%arg0: i32) -> (i32, i32) {
    %c0_i32 = arith.constant 0 : i32
    %c0_i32_0 = arith.constant 0 : i32
    %c0_i32_1 = arith.constant 0 : i32
    return %c0_i32, %c0_i32_0 : i32, i32
  }
  func.func @transform_4(%arg0: i32) -> (i32, i32) {
    %c0_i32 = arith.constant 0 : i32
    %c0_i32_0 = arith.constant 0 : i32
    %c0_i32_1 = arith.constant 0 : i32
    return %c0_i32, %c0_i32_0 : i32, i32
  }
  func.func @transform_5(%arg0: i32) -> (i32, i32) {
    %c0_i32 = arith.constant 0 : i32
    %c0_i32_0 = arith.constant 0 : i32
    return %arg0, %c0_i32 : i32, i32
  }
}

</mosaic_0001>

<llo_original>
// kernel: tpu_custom_call.1
$region0: #{tpu_custom_call.1}
  #allocation0 [shape = 'u32[]', space=smem, size = 0x4, offset = 0x4, fixed_abs, tag = 'smem constant byte address 0x4 - core index']
  #allocation1 [shape = 'u32[72,128]{1,0:T(1,128)}', space=vmem, size = 0x9000, scoped, tag = 'internal scratch']
  %s0 = inlined_call_operand.hbm [shape: bf16[32,32], index: 0, kind: input, shape index: {}]
  %s1 = inlined_call_operand.hbm [shape: bf16[32,128], index: 1, kind: input, shape index: {}]
  %s2 = inlined_call_operand.hbm [shape: bf16[128,128], index: 2, kind: input, shape index: {}]
  %s3 = inlined_call_operand.hbm [shape: bf16[128,128], index: 3, kind: input, shape index: {}]
  %s4 = inlined_call_operand.hbm [shape: f32[3,128], index: 4, kind: input, shape index: {}]
  %s5 = inlined_call_operand.hbm [shape: bf16[32,128], index: 5, kind: output, shape index: {}]
  %s6 = sld [smem:[#allocation0]]
  $region50: #{tpu_custom_call.1} parent=0
    _
  %s8 = ssub.s32 1, %s6
  %s9 = scalar_select 0, %s8, %s6
  $region1: #{tpu_custom_call.1} parent=0
    #allocation2 [shape = 'u8[8192]{0}', space=vmem, size = 0x2000, scoped, tag = 'input window, operand 0, single buffered']
    #allocation3 [shape = 's32[1]{0}', space=sflag, size = 0x4, scoped, tag = 'scoped memory for tpu_custom_call.1']
    #allocation4 [shape = 's32[1]{0}', space=sflag, size = 0x4, scoped, tag = 'scoped memory for tpu_custom_call.1']
    #allocation5 [shape = 'u8[8192]{0}', space=vmem, size = 0x2000, scoped, tag = 'input window, operand 1, single buffered']
    #allocation6 [shape = 's32[1]{0}', space=sflag, size = 0x4, scoped, tag = 'scoped memory for tpu_custom_call.1']
    #allocation7 [shape = 'u8[32768]{0}', space=vmem, size = 0x8000, scoped, tag = 'input window, operand 2, single buffered']
    #allocation8 [shape = 'u8[32768]{0}', space=vmem, size = 0x8000, scoped, tag = 'input window, operand 3, single buffered']
    #allocation9 [shape = 's32[1]{0}', space=sflag, size = 0x4, scoped, tag = 'scoped memory for tpu_custom_call.1']
    #allocation10 [shape = 'u8[2048]{0}', space=vmem, size = 0x800, scoped, tag = 'input window, operand 4, single buffered']
    #allocation11 [shape = 'u8[8192]{0}', space=vmem, size = 0x2000, scoped, tag = 'output window, operand 0, single buffered']
    %10 = vsyncpa [#allocation3], 0
    %11 = vsyncpa [#allocation6], 0
    %12 = vsyncpa [#allocation9], 0
    %13 = vsyncpa [#allocation4], 0
    // Predicated region
    $region2: #{tpu_custom_call.1} parent=1 // pred_check
      _
    $region3: #{tpu_custom_call.1} parent=1 // pred_check_branch
      %15 = sbr.rel (0) target = $region5
    $region4: #{tpu_custom_call.1} parent=1 // pred_region
      %17 = vsyncadd [#allocation3], 0
      %s18 = sshll.u32 %s0, 4
      %s19 = int_to_ptr.hbm [resolvable:$true] %s18
      %s20 = sshll.u32 [#allocation2], 4
      %s21 = int_to_ptr.vmem [resolvable:$true] %s20
      %26 = dma.hbm_to_vmem [thread:$0]  %s19, 256, %s21, [#allocation3], 64, 64, 4
    $region5: #{tpu_custom_call.1} parent=1 // pred_fallthru
      _
    // Predicated region
    $region6: #{tpu_custom_call.1} parent=1 // pred_check
      _
    $region7: #{tpu_custom_call.1} parent=1 // pred_check_branch
      %28 = sbr.rel (0) target = $region9
    $region8: #{tpu_custom_call.1} parent=1 // pred_region
      %30 = vsyncadd [#allocation6], 0
      %s31 = sshll.u32 %s1, 4
      %s32 = int_to_ptr.hbm [resolvable:$true] %s31
      %s33 = sshll.u32 [#allocation5], 4
      %s34 = int_to_ptr.vmem [resolvable:$true] %s33
      %39 = dma.hbm_to_vmem [thread:$0]  %s32, 256, %s34, [#allocation6], 64, 64, 4
    $region9: #{tpu_custom_call.1} parent=1 // pred_fallthru
      _
    // Predicated region
    $region10: #{tpu_custom_call.1} parent=1 // pred_check
      _
    $region11: #{tpu_custom_call.1} parent=1 // pred_check_branch
      %41 = sbr.rel (0) target = $region13
    $region12: #{tpu_custom_call.1} parent=1 // pred_region
      %43 = vsyncadd [#allocation6], 0
      %s44 = sshll.u32 %s2, 4
      %s45 = int_to_ptr.hbm [resolvable:$true] %s44
      %s46 = sshll.u32 [#allocation7], 4
      %s47 = int_to_ptr.vmem [resolvable:$true] %s46
      %52 = dma.hbm_to_vmem [thread:$0]  %s45, 1024, %s47, [#allocation6], 64, 64, 4
    $region13: #{tpu_custom_call.1} parent=1 // pred_fallthru
      _
    // Predicated region
    $region14: #{tpu_custom_call.1} parent=1 // pred_check
      _
    $region15: #{tpu_custom_call.1} parent=1 // pred_check_branch
      %54 = sbr.rel (0) target = $region17
    $region16: #{tpu_custom_call.1} parent=1 // pred_region
      %56 = vsyncadd [#allocation9], 0
      %s57 = sshll.u32 %s3, 4
      %s58 = int_to_ptr.hbm [resolvable:$true] %s57
      %s59 = sshll.u32 [#allocation8], 4
      %s60 = int_to_ptr.vmem [resolvable:$true] %s59
      %65 = dma.hbm_to_vmem [thread:$0]  %s58, 1024, %s60, [#allocation9], 64, 64, 4
    $region17: #{tpu_custom_call.1} parent=1 // pred_fallthru
      _
    // Predicated region
    $region18: #{tpu_custom_call.1} parent=1 // pred_check
      _
    $region19: #{tpu_custom_call.1} parent=1 // pred_check_branch
      %67 = sbr.rel (0) target = $region21
    $region20: #{tpu_custom_call.1} parent=1 // pred_region
      %69 = vsyncadd [#allocation9], 0
      %s71 = sshll.u32 %s4, 4
      %s72 = int_to_ptr.hbm [resolvable:$true] %s71
      %s73 = sshll.u32 [#allocation10], 4
      %s74 = int_to_ptr.vmem [resolvable:$true] %s73
      %76 = dma.hbm_to_vmem [thread:$0]  %s72, 64, %s74, [#allocation9]
    $region21: #{tpu_custom_call.1} parent=1 // pred_fallthru
      _
    // Predicated region
    $region22: #{tpu_custom_call.1} parent=1 // pred_check
      _
    $region23: #{tpu_custom_call.1} parent=1 // pred_check_branch
      %78 = sbr.rel (0) target = $region25
    $region24: #{tpu_custom_call.1} parent=1 // pred_region
      %80 = dma.done [#allocation3], 256
    $region25: #{tpu_custom_call.1} parent=1 // pred_fallthru
      _
    // Predicated region
    $region26: #{tpu_custom_call.1} parent=1 // pred_check
      _
    $region27: #{tpu_custom_call.1} parent=1 // pred_check_branch
      %82 = sbr.rel (0) target = $region29
    $region28: #{tpu_custom_call.1} parent=1 // pred_region
      %84 = dma.done [#allocation6], 256
    $region29: #{tpu_custom_call.1} parent=1 // pred_fallthru
      _
    // Predicated region
    $region30: #{tpu_custom_call.1} parent=1 // pred_check
      _
    $region31: #{tpu_custom_call.1} parent=1 // pred_check_branch
      %86 = sbr.rel (0) target = $region33
    $region32: #{tpu_custom_call.1} parent=1 // pred_region
      %88 = dma.done [#allocation6], 1024
    $region33: #{tpu_custom_call.1} parent=1 // pred_fallthru
      _
    // Predicated region
    $region34: #{tpu_custom_call.1} parent=1 // pred_check
      _
    $region35: #{tpu_custom_call.1} parent=1 // pred_check_branch
      %90 = sbr.rel (0) target = $region37
    $region36: #{tpu_custom_call.1} parent=1 // pred_region
      %92 = dma.done [#allocation9], 1024
    $region37: #{tpu_custom_call.1} parent=1 // pred_fallthru
      _
    // Predicated region
    $region38: #{tpu_custom_call.1} parent=1 // pred_check
      _
    $region39: #{tpu_custom_call.1} parent=1 // pred_check_branch
      %94 = sbr.rel (0) target = $region41
    $region40: #{tpu_custom_call.1} parent=1 // pred_region
      %96 = dma.done [#allocation9], 64
    $region41: #{tpu_custom_call.1} parent=1 // pred_fallthru
      _
    %v98 = vld [vmem:[#allocation10] sm:$0x7]
    %v99 = vld [vmem:[#allocation2] sm:$0xf]
    %v100 = vld [vmem:[#allocation2 + $0x4] sm:$0xf]
    %v101 = vld [vmem:[#allocation2 + $0x8] sm:$0xf]
    %v102 = vld [vmem:[#allocation2 + $0xc] sm:$0xf]
    %v103 = vld [vmem:[#allocation5] sm:$0xf]
    %v104 = vld [vmem:[#allocation5 + $0x4] sm:$0xf]
    %v105 = vld [vmem:[#allocation5 + $0x8] sm:$0xf]
    %v106 = vld [vmem:[#allocation5 + $0xc] sm:$0xf]
    %v107 = vperm.slane %v98, 0
    %v112 = vunpack.c.l.b16 %v99
    %v113 = vunpack.c.l.b16 %v100
    %v114 = vunpack.c.l.b16 %v101
    %v115 = vunpack.c.l.b16 %v102
    %v116 = vpack.c.b16 %v113, %v112
    %v117 = vpack.c.b16 %v115, %v114
    %v122 = vunpack.c.l.b16 %v103
    %v123 = vunpack.c.l.b16 %v104
    %v124 = vunpack.c.l.b16 %v105
    %v125 = vunpack.c.l.b16 %v106
    %v126 = vpack.c.b16 %v123, %v122
    %v127 = vpack.c.b16 %v125, %v124
    %vm130 = vcmask 261120
    %v132 = vsel %vm130, %v116, 0
    %v135 = vsel %vm130, %v117, 0
    %137 = vmatpush.bf16.msra.mxu0 0
    %138 = vmatpush.bf16.msra.mxu0 0
    %139 = vmatpush.bf16.msra.mxu0 0
    %140 = vmatpush.bf16.msra.mxu0 0
    %141 = vmatpush.bf16.msra.mxu0 0
    %142 = vmatpush.bf16.msra.mxu0 0
    %143 = vmatpush.bf16.msra.mxu0 %v127
    %144 = vmatpush.bf16.msra.mxu0 %v126
    %145 = vmatmul.bf16.gmra.mxu0 %v132
    %v146 = vpop.f32.mrf.mxu0
    %v147 = vadd.f32 %v107, %v146
    %v148 = vpop.f32.mrf.mxu0
    %v149 = vadd.f32 %v107, %v148
    %150 = vmatmul.bf16.gmra.mxu0 %v135
    %v151 = vpop.f32.mrf.mxu0
    %v152 = vadd.f32 %v107, %v151
    %v153 = vpop.f32.mrf.mxu0
    %v154 = vadd.f32 %v107, %v153
    %155 = vdwg.mxu0
    %v156 = vmax.f32 %v147, 0.0
    %v157 = vmax.f32 %v149, 0.0
    %v158 = vmax.f32 %v152, 0.0
    %v159 = vmax.f32 %v154, 0.0
    %v160 = vpack.c.bf16 %v157, %v156
    %v161 = vpack.c.bf16 %v159, %v158
    %v162 = vld [vmem:[#allocation7] sm:$0xf]
    %v163 = vld [vmem:[#allocation7 + $0x4] sm:$0xf]
    %v164 = vld [vmem:[#allocation7 + $0x8] sm:$0xf]
    %v165 = vld [vmem:[#allocation7 + $0xc] sm:$0xf]
    %v166 = vld [vmem:[#allocation7 + $0x10] sm:$0xf]
    %v167 = vld [vmem:[#allocation7 + $0x14] sm:$0xf]
    %v168 = vld [vmem:[#allocation7 + $0x18] sm:$0xf]
    %v169 = vld [vmem:[#allocation7 + $0x1c] sm:$0xf]
    %v170 = vld [vmem:[#allocation7 + $0x20] sm:$0xf]
    %v171 = vld [vmem:[#allocation7 + $0x24] sm:$0xf]
    %v172 = vld [vmem:[#allocation7 + $0x28] sm:$0xf]
    %v173 = vld [vmem:[#allocation7 + $0x2c] sm:$0xf]
    %v174 = vld [vmem:[#allocation7 + $0x30] sm:$0xf]
    %v175 = vld [vmem:[#allocation7 + $0x34] sm:$0xf]
    %v176 = vld [vmem:[#allocation7 + $0x38] sm:$0xf]
    %v177 = vld [vmem:[#allocation7 + $0x3c] sm:$0xf]
    %v178 = vperm.slane %v98, 1
    %v195 = vunpack.c.l.b16 %v162
    %v196 = vunpack.c.l.b16 %v163
    %v197 = vunpack.c.l.b16 %v164
    %v198 = vunpack.c.l.b16 %v165
    %v199 = vunpack.c.l.b16 %v166
    %v200 = vunpack.c.l.b16 %v167
    %v201 = vunpack.c.l.b16 %v168
    %v202 = vunpack.c.l.b16 %v169
    %v203 = vunpack.c.l.b16 %v170
    %v204 = vunpack.c.l.b16 %v171
    %v205 = vunpack.c.l.b16 %v172
    %v206 = vunpack.c.l.b16 %v173
    %v207 = vunpack.c.l.b16 %v174
    %v208 = vunpack.c.l.b16 %v175
    %v209 = vunpack.c.l.b16 %v176
    %v210 = vunpack.c.l.b16 %v177
    %v211 = vpack.c.b16 %v196, %v195
    %v212 = vpack.c.b16 %v198, %v197
    %v213 = vpack.c.b16 %v200, %v199
    %v214 = vpack.c.b16 %v202, %v201
    %v215 = vpack.c.b16 %v204, %v203
    %v216 = vpack.c.b16 %v206, %v205
    %v217 = vpack.c.b16 %v208, %v207
    %v218 = vpack.c.b16 %v210, %v209
    %227 = vmatpush.bf16.msra.mxu0 %v218
    %228 = vmatpush.bf16.msra.mxu0 %v217
    %229 = vmatpush.bf16.msra.mxu0 %v216
    %230 = vmatpush.bf16.msra.mxu0 %v215
    %231 = vmatpush.bf16.msra.mxu0 %v214
    %232 = vmatpush.bf16.msra.mxu0 %v213
    %233 = vmatpush.bf16.msra.mxu0 %v212
    %234 = vmatpush.bf16.msra.mxu0 %v211
    %235 = vmatmul.bf16.gmra.mxu0 %v160
    %v236 = vpop.f32.mrf.mxu0
    %v237 = vadd.f32 %v178, %v236
    %v238 = vpop.f32.mrf.mxu0
    %v239 = vadd.f32 %v178, %v238
    %240 = vmatmul.bf16.gmra.mxu0 %v161
    %v241 = vpop.f32.mrf.mxu0
    %v242 = vadd.f32 %v178, %v241
    %v243 = vpop.f32.mrf.mxu0
    %v244 = vadd.f32 %v178, %v243
    %245 = vdwg.mxu0
    %v246 = vmax.f32 %v237, 0.0
    %v247 = vmax.f32 %v239, 0.0
    %v248 = vmax.f32 %v242, 0.0
    %v249 = vmax.f32 %v244, 0.0
    %v250 = vpack.c.bf16 %v247, %v246
    %v251 = vpack.c.bf16 %v249, %v248
    %v252 = vld [vmem:[#allocation8] sm:$0xf]
    %v253 = vld [vmem:[#allocation8 + $0x4] sm:$0xf]
    %v254 = vld [vmem:[#allocation8 + $0x8] sm:$0xf]
    %v255 = vld [vmem:[#allocation8 + $0xc] sm:$0xf]
    %v256 = vld [vmem:[#allocation8 + $0x10] sm:$0xf]
    %v257 = vld [vmem:[#allocation8 + $0x14] sm:$0xf]
    %v258 = vld [vmem:[#allocation8 + $0x18] sm:$0xf]
    %v259 = vld [vmem:[#allocation8 + $0x1c] sm:$0xf]
    %v260 = vld [vmem:[#allocation8 + $0x20] sm:$0xf]
    %v261 = vld [vmem:[#allocation8 + $0x24] sm:$0xf]
    %v262 = vld [vmem:[#allocation8 + $0x28] sm:$0xf]
    %v263 = vld [vmem:[#allocation8 + $0x2c] sm:$0xf]
    %v264 = vld [vmem:[#allocation8 + $0x30] sm:$0xf]
    %v265 = vld [vmem:[#allocation8 + $0x34] sm:$0xf]
    %v266 = vld [vmem:[#allocation8 + $0x38] sm:$0xf]
    %v267 = vld [vmem:[#allocation8 + $0x3c] sm:$0xf]
    %v268 = vperm.slane %v98, 2
    %v285 = vunpack.c.l.b16 %v252
    %v286 = vunpack.c.l.b16 %v253
    %v287 = vunpack.c.l.b16 %v254
    %v288 = vunpack.c.l.b16 %v255
    %v289 = vunpack.c.l.b16 %v256
    %v290 = vunpack.c.l.b16 %v257
    %v291 = vunpack.c.l.b16 %v258
    %v292 = vunpack.c.l.b16 %v259
    %v293 = vunpack.c.l.b16 %v260
    %v294 = vunpack.c.l.b16 %v261
    %v295 = vunpack.c.l.b16 %v262
    %v296 = vunpack.c.l.b16 %v263
    %v297 = vunpack.c.l.b16 %v264
    %v298 = vunpack.c.l.b16 %v265
    %v299 = vunpack.c.l.b16 %v266
    %v300 = vunpack.c.l.b16 %v267
    %v301 = vpack.c.b16 %v286, %v285
    %v302 = vpack.c.b16 %v288, %v287
    %v303 = vpack.c.b16 %v290, %v289
    %v304 = vpack.c.b16 %v292, %v291
    %v305 = vpack.c.b16 %v294, %v293
    %v306 = vpack.c.b16 %v296, %v295
    %v307 = vpack.c.b16 %v298, %v297
    %v308 = vpack.c.b16 %v300, %v299
    %317 = vmatpush.bf16.msra.mxu0 %v308
    %318 = vmatpush.bf16.msra.mxu0 %v307
    %319 = vmatpush.bf16.msra.mxu0 %v306
    %320 = vmatpush.bf16.msra.mxu0 %v305
    %321 = vmatpush.bf16.msra.mxu0 %v304
    %322 = vmatpush.bf16.msra.mxu0 %v303
    %323 = vmatpush.bf16.msra.mxu0 %v302
    %324 = vmatpush.bf16.msra.mxu0 %v301
    %325 = vmatmul.bf16.gmra.mxu0 %v250
    %v326 = vpop.f32.mrf.mxu0
    %v327 = vadd.f32 %v268, %v326
    %v328 = vpop.f32.mrf.mxu0
    %v329 = vadd.f32 %v268, %v328
    %330 = vmatmul.bf16.gmra.mxu0 %v251
    %v331 = vpop.f32.mrf.mxu0
    %v332 = vadd.f32 %v268, %v331
    %v333 = vpop.f32.mrf.mxu0
    %v334 = vadd.f32 %v268, %v333
    %335 = vdwg.mxu0
    %336 = vmax.xlane.f32.xlu0 %v327
    %v337 = vpop.xlane.xlu0 %336
    %338 = vmax.xlane.f32.xlu0 %v329
    %v339 = vpop.xlane.xlu0 %338
    %340 = vmax.xlane.f32.xlu0 %v332
    %v341 = vpop.xlane.xlu0 %340
    %342 = vmax.xlane.f32.xlu0 %v334
    %v343 = vpop.xlane.xlu0 %342
    %v344 = vsub.f32 %v327, %v337
    %v345 = vsub.f32 %v329, %v339
    %v346 = vsub.f32 %v332, %v341
    %v347 = vsub.f32 %v334, %v343
    %v348 = vmul.f32 %v344, 1.442695
    %v349 = vpow.pop %v348
    %v350 = vmul.f32 %v345, 1.442695
    %v351 = vpow.pop %v350
    %v352 = vmul.f32 %v346, 1.442695
    %v353 = vpow.pop %v352
    %v354 = vmul.f32 %v347, 1.442695
    %v355 = vpow.pop %v354
    %356 = vadd.xlane.f32.xlu0 %v349
    %v357 = vpop.xlane.xlu0 %356
    %358 = vadd.xlane.f32.xlu0 %v351
    %v359 = vpop.xlane.xlu0 %358
    %360 = vadd.xlane.f32.xlu0 %v353
    %v361 = vpop.xlane.xlu0 %360
    %362 = vadd.xlane.f32.xlu0 %v355
    %v363 = vpop.xlane.xlu0 %362
    %v364 = vrcp.pop %v357
    %v365 = vrcp.pop %v359
    %v366 = vrcp.pop %v361
    %v367 = vrcp.pop %v363
    %v368 = vmul.f32 %v349, %v364
    %v369 = vmul.f32 %v351, %v365
    %v370 = vmul.f32 %v353, %v366
    %v371 = vmul.f32 %v355, %v367
    %v372 = vpack.c.bf16 %v368, %v368
    %v373 = vpack.c.bf16 %v369, %v369
    %v374 = vpack.c.bf16 %v370, %v370
    %v375 = vpack.c.bf16 %v371, %v371
    %376 = vst [vmem:[#allocation11] sm:$0xf] %v372
    %377 = vst [vmem:[#allocation11 + $0x4] sm:$0xf] %v373
    %378 = vst [vmem:[#allocation11 + $0x8] sm:$0xf] %v374
    %379 = vst [vmem:[#allocation11 + $0xc] sm:$0xf] %v375
    // Predicated region
    $region42: #{tpu_custom_call.1} parent=1 // pred_check
      _
    $region43: #{tpu_custom_call.1} parent=1 // pred_check_branch
      %381 = sbr.rel (0) target = $region45
    $region44: #{tpu_custom_call.1} parent=1 // pred_region
      %383 = vsyncadd [#allocation4], 0
      %s384 = sshll.u32 [#allocation11], 4
      %s385 = int_to_ptr.vmem [resolvable:$true] %s384
      %s386 = sshll.u32 %s5, 4
      %s387 = int_to_ptr.hbm [resolvable:$true] %s386
      %392 = dma.vmem_to_hbm [thread:$0]  %s385, 256, %s387, [#allocation4], 64, 64, 4
    $region45: #{tpu_custom_call.1} parent=1 // pred_fallthru
      _
    // Predicated region
    $region46: #{tpu_custom_call.1} parent=1 // pred_check
      _
    $region47: #{tpu_custom_call.1} parent=1 // pred_check_branch
      %394 = sbr.rel (0) target = $region49
    $region48: #{tpu_custom_call.1} parent=1 // pred_region
      %396 = dma.done [#allocation4], 256
    $region49: #{tpu_custom_call.1} parent=1 // pred_fallthru
      _
    %397 = vsyncpa [#allocation3], 1
    %398 = vsyncpa [#allocation6], 1
    %399 = vsyncpa [#allocation9], 1
    %400 = vsyncpa [#allocation4], 1

</llo_original>
